<compile_context>
chip_gen: v5e
topology: v5e:2x2
jax: 0.10.0
libtpu: 0.0.40
codegen_flags: <defaults>
</compile_context>

<pallas_src>
import functools

import jax
import jax.numpy as jnp
from jax.experimental import pallas as pl
from jax.experimental.pallas import tpu as pltpu

EPS = 1e-6
_INV_SQRT2 = 0.7071067811865475
_VMEM_LIMIT = 48 * 1024 * 1024      # below v7x's 64 MiB physical VMEM
_ROW_TILE = 512                     # rows per grid step for the tiled kernels


# ----------------------------- Pallas kernels ------------------------------

def _stem_kernel(x_ref, w_ref, b_ref, g_ref, beta_ref, o_ref, *, eps):
    # stem: patch-embed conv (as matmul on patch rows) fused with LayerNorm2d.
    x = x_ref[...].astype(jnp.bfloat16)
    y = jnp.dot(x, w_ref[...], preferred_element_type=jnp.float32) + b_ref[...]
    mu = jnp.mean(y, axis=-1, keepdims=True)
    var = jnp.mean((y - mu) ** 2, axis=-1, keepdims=True)
    o_ref[...] = (y - mu) * jax.lax.rsqrt(var + eps) * g_ref[...] + beta_ref[...]


def _downsample_kernel(x_ref, g_ref, b_ref, w_ref, fb_ref, o_ref, *, eps):
    # Fused stage downsample: LayerNorm2d (per pixel, over C) followed by the
    # 2x2/stride-2 conv expressed as 4 MXU matmuls over the non-overlapping
    # pixel positions of each patch row.
    #   x_ref: (rows, 4, C) pixel-contiguous patches   w_ref: (4, C, M)
    x = x_ref[...]
    mu = jnp.mean(x, axis=-1, keepdims=True)
    var = jnp.mean((x - mu) ** 2, axis=-1, keepdims=True)
    xn = ((x - mu) * jax.lax.rsqrt(var + eps) * g_ref[...]
          + b_ref[...]).astype(jnp.bfloat16)
    rows = x_ref.shape[0]
    m = w_ref.shape[-1]
    acc = jnp.zeros((rows, m), jnp.float32)
    for k in range(4):
        acc = acc + jnp.dot(xn[:, k, :], w_ref[k],
                            preferred_element_type=jnp.float32)
    o_ref[...] = acc + fb_ref[...]


def _block_kernel(x_ref, dww_ref, dwb_ref, lng_ref, lnb_ref, w1_ref, b1_ref,
                  w2_ref, b2_ref, gls_ref, o_ref, xp_scr, *, H, W, eps):
    # One full ConvNeXt block for one image:
    #   dwconv7(pad=3) -> LayerNorm(channels-last) -> Linear(C,4C) -> GELU
    #   -> Linear(4C,C) -> layer scale (gamma) -> + shortcut
    C = x_ref.shape[-1]
    x = x_ref[0]                                     # (H, W, C) f32

    # zero-pad into VMEM scratch (no padded HBM copy per block)
    xp_scr[...] = jnp.zeros(xp_scr.shape, xp_scr.dtype)
    xp_scr[3:3 + H, 3:3 + W, :] = x
    xp = xp_scr[...]                                 # (H+6, W+6, C)

    w = dww_ref[...]                                 # (7, 7, C)
    acc = jnp.zeros((H, W, C), jnp.float32)
    for i in range(7):
        for j in range(7):
            acc = acc + xp[i:i + H, j:j + W, :] * w[i, j, :]
    # TODO(synk): for large H,W tile the dwconv over spatial rows with a halo
    # instead of one (H,W,C) accumulator per image.
    y = (acc + dwb_ref[...]).reshape(H * W, C)       # flatten spatial -> rows
    sc = x.reshape(H * W, C)                         # shortcut, read once

    mu = jnp.mean(y, axis=-1, keepdims=True)
    var = jnp.mean((y - mu) ** 2, axis=-1, keepdims=True)
    xn = (y - mu) * jax.lax.rsqrt(var + eps) * lng_ref[...] + lnb_ref[...]

    h = jnp.dot(xn.astype(jnp.bfloat16), w1_ref[...],
                preferred_element_type=jnp.float32) + b1_ref[...]
    h = 0.5 * h * (1.0 + jax.lax.erf(h * _INV_SQRT2))    # exact GELU
    o = jnp.dot(h.astype(jnp.bfloat16), w2_ref[...],
                preferred_element_type=jnp.float32) + b2_ref[...]

    o_ref[0] = (o * gls_ref[...] + sc).reshape(H, W, C)


def _head_kernel(x_ref, g_ref, b_ref, w_ref, fb_ref, o_ref, *, eps):
    # head: global avg pool -> LayerNorm2d -> Linear (head_norm_first=False).
    B, H, W, C = x_ref.shape
    x = x_ref[...].reshape(B, H * W, C)
    pooled = jnp.mean(x, axis=1)                     # (B, C)
    mu = jnp.mean(pooled, axis=-1, keepdims=True)
    var = jnp.mean((pooled - mu) ** 2, axis=-1, keepdims=True)
    xn = (pooled - mu) * jax.lax.rsqrt(var + eps) * g_ref[...] + b_ref[...]
    o_ref[...] = jnp.dot(xn.astype(jnp.bfloat16), w_ref[...],
                         preferred_element_type=jnp.float32) + fb_ref[...]


# ------------------------------ kernel wrappers -----------------------------

def _row_grid(n):
    # Single full block when small; otherwise 512-row tiles (multiple of 8).
    if n <= _ROW_TILE:
        return 1, n
    return pl.cdiv(n, _ROW_TILE), _ROW_TILE


def stem_conv_ln(x, w, b, g, beta, eps=EPS):
    n, k = x.shape
    m = w.shape[1]
    gn, tile = _row_grid(n)
    return pl.pallas_call(
        functools.partial(_stem_kernel, eps=eps),
        out_shape=jax.ShapeDtypeStruct((n, m), jnp.float32),
        grid=(gn,),
        in_specs=[
            pl.BlockSpec((tile, k), lambda i: (i, 0)),
            pl.BlockSpec((k, m), lambda i: (0, 0)),      # weight stays resident
            pl.BlockSpec((1, m), lambda i: (0, 0)),
            pl.BlockSpec((1, m), lambda i: (0, 0)),
            pl.BlockSpec((1, m), lambda i: (0, 0)),
        ],
        out_specs=pl.BlockSpec((tile, m), lambda i: (i, 0)),
        compiler_params=pltpu.CompilerParams(
            dimension_semantics=("parallel",), vmem_limit_bytes=_VMEM_LIMIT),
        cost_estimate=pl.CostEstimate(
            flops=2 * n * k * m + 8 * n * m, transcendentals=n,
            bytes_accessed=4 * n * (k + m) + 2 * k * m),
    )(x, w, b, g, beta)


def downsample_ln_conv(patches, g, b, w, fb, eps=EPS):
    # patches: (rows, 4, C) pixel-contiguous; w: (4, C, M).
    n, _, c = patches.shape
    m = w.shape[-1]
    gn, tile = _row_grid(n)
    return pl.pallas_call(
        functools.partial(_downsample_kernel, eps=eps),
        out_shape=jax.ShapeDtypeStruct((n, m), jnp.float32),
        grid=(gn,),
        in_specs=[
            pl.BlockSpec((tile, 4, c), lambda i: (i, 0, 0)),
            pl.BlockSpec((1, c), lambda i: (0, 0)),
            pl.BlockSpec((1, c), lambda i: (0, 0)),
            pl.BlockSpec((4, c, m), lambda i: (0, 0, 0)),
            pl.BlockSpec((1, m), lambda i: (0, 0)),
        ],
        out_specs=pl.BlockSpec((tile, m), lambda i: (i, 0)),
        compiler_params=pltpu.CompilerParams(
            dimension_semantics=("parallel",), vmem_limit_bytes=_VMEM_LIMIT),
        cost_estimate=pl.CostEstimate(
            flops=2 * n * 4 * c * m + 10 * n * 4 * c, transcendentals=4 * n,
            bytes_accessed=4 * n * (4 * c + m) + 2 * 4 * c * m),
    )(patches, g, b, w, fb)


def head_pool_ln_fc(x, g, b, w, fb, eps=EPS):
    # Tiny problem: single un-gridded call; output is 128-lane padded.
    n = x.shape[0]
    m = w.shape[1]
    vspec = pl.BlockSpec(memory_space=pltpu.MemorySpace.VMEM)
    return pl.pallas_call(
        functools.partial(_head_kernel, eps=eps),
        out_shape=jax.ShapeDtypeStruct((n, m), jnp.float32),
        in_specs=[vspec] * 5,
        out_specs=vspec,
        compiler_params=pltpu.CompilerParams(vmem_limit_bytes=_VMEM_LIMIT),
    )(x, g, b, w, fb)


def convnext_block(x, p, eps=EPS):
    B, H, W, C = x.shape
    rows = H * W
    flops = B * (rows * C * 49 * 2 + 2 * 2 * rows * C * 4 * C)
    return pl.pallas_call(
        functools.partial(_block_kernel, H=H, W=W, eps=eps),
        out_shape=jax.ShapeDtypeStruct((B, H, W, C), jnp.float32),
        grid=(B,),
        in_specs=[
            pl.BlockSpec((1, H, W, C), lambda i: (i, 0, 0, 0)),
            pl.BlockSpec((7, 7, C), lambda i: (0, 0, 0)),
            pl.BlockSpec((1, 1, C), lambda i: (0, 0, 0)),
            pl.BlockSpec((1, C), lambda i: (0, 0)),
            pl.BlockSpec((1, C), lambda i: (0, 0)),
            pl.BlockSpec((C, 4 * C), lambda i: (0, 0)),
            pl.BlockSpec((1, 4 * C), lambda i: (0, 0)),
            pl.BlockSpec((4 * C, C), lambda i: (0, 0)),
            pl.BlockSpec((1, C), lambda i: (0, 0)),
            pl.BlockSpec((1, C), lambda i: (0, 0)),
        ],
        out_specs=pl.BlockSpec((1, H, W, C), lambda i: (i, 0, 0, 0)),
        scratch_shapes=[pltpu.VMEM((H + 6, W + 6, C), jnp.float32)],
        compiler_params=pltpu.CompilerParams(
            dimension_semantics=("parallel",), vmem_limit_bytes=_VMEM_LIMIT),
        cost_estimate=pl.CostEstimate(
            flops=flops, transcendentals=B * rows * 4 * C,
            bytes_accessed=8 * B * rows * C),
    )(x, p['dw_w'], p['dw_b'], p['ln_g'], p['ln_b'],
      p['w1'], p['b1'], p['w2'], p['b2'], p['gamma'])


# --------------------------------- glue ------------------------------------

def patchify_stem(x, p):
    """Non-overlapping p x p patches of an NHWC tensor, flattened (C, kh, kw)."""
    B, H, W, C = x.shape
    Ho, Wo = H // p, W // p
    x = x.reshape(B, Ho, p, Wo, p, C)
    x = x.transpose(0, 1, 3, 5, 2, 4)                # (B, Ho, Wo, C, p, p)
    return x.reshape(B * Ho * Wo, C * p * p), (B, Ho, Wo)


def patchify_ds(x):
    """2x2 non-overlapping patches, pixel-contiguous rows: (rows, 4, C)."""
    B, H, W, C = x.shape
    Ho, Wo = H // 2, W // 2
    x = x.reshape(B, Ho, 2, Wo, 2, C)
    x = x.transpose(0, 1, 3, 2, 4, 5)                # (B, Ho, Wo, kh, kw, C)
    return x.reshape(B * Ho * Wo, 4, C), (B, Ho, Wo)


def init_params(key, in_chans, dims, depths, num_classes, patch_size):
    keys = iter(jax.random.split(key, 256))

    def tn(shape):   # trunc_normal_(std=0.02); biases zero-inited (_init_weights)
        return 0.02 * jax.random.truncated_normal(next(keys), -2.0, 2.0, shape,
                                                  jnp.float32)

    nc_pad = max(128, ((num_classes + 127) // 128) * 128)   # lane-dense head
    fc_w = jnp.zeros((dims[-1], nc_pad), jnp.float32)
    fc_w = fc_w.at[:, :num_classes].set(tn((dims[-1], num_classes)))

    params = {
        'stem': {
            'w': tn((in_chans * patch_size * patch_size, dims[0])).astype(jnp.bfloat16),
            'b': jnp.zeros((1, dims[0]), jnp.float32),
            'ln_g': jnp.ones((1, dims[0]), jnp.float32),
            'ln_b': jnp.zeros((1, dims[0]), jnp.float32),
        },
        'stages': [],
        'head': {
            'ln_g': jnp.ones((1, dims[-1]), jnp.float32),
            'ln_b': jnp.zeros((1, dims[-1]), jnp.float32),
            'fc_w': fc_w.astype(jnp.bfloat16),
            'fc_b': jnp.zeros((1, nc_pad), jnp.float32),
        },
        'nc_pad': nc_pad,
    }

    prev = dims[0]
    for i in range(4):
        out = dims[i]
        stride = 1 if i == 0 else 2
        stage = {'blocks': []}
        if prev != out or stride > 1:   # downsample: LayerNorm2d + 2x2 s2 conv
            stage['ds_ln_g'] = jnp.ones((1, prev), jnp.float32)
            stage['ds_ln_b'] = jnp.zeros((1, prev), jnp.float32)
            stage['ds_w'] = tn((4, prev, out)).astype(jnp.bfloat16)
            stage['ds_b'] = jnp.zeros((1, out), jnp.float32)
        for _ in range(depths[i]):
            stage['blocks'].append({
                'dw_w': tn((7, 7, out)),
                'dw_b': jnp.zeros((1, 1, out), jnp.float32),
                'ln_g': jnp.ones((1, out), jnp.float32),
                'ln_b': jnp.zeros((1, out), jnp.float32),
                'w1': tn((out, 4 * out)).astype(jnp.bfloat16),
                'b1': jnp.zeros((1, 4 * out), jnp.float32),
                'w2': tn((4 * out, out)).astype(jnp.bfloat16),
                'b2': jnp.zeros((1, out), jnp.float32),
                'gamma': 1e-6 * jnp.ones((1, out), jnp.float32),   # layer scale
            })
        params['stages'].append(stage)
        prev = out
    return params


def convnext_forward(params, x_nchw, *, patch_size, dims, num_classes):
    x = jnp.transpose(x_nchw, (0, 2, 3, 1)).astype(jnp.float32)   # NCHW -> NHWC

    # --- stem: patch conv (matmul on 4x4 patches) fused with LayerNorm2d ---
    patches, (B, Ho, Wo) = patchify_stem(x, patch_size)
    y = stem_conv_ln(patches, params['stem']['w'], params['stem']['b'],
                     params['stem']['ln_g'], params['stem']['ln_b'])
    x = y.reshape(B, Ho, Wo, dims[0])

    # --- stages ---
    for i, stage in enumerate(params['stages']):
        if 'ds_w' in stage:
            # fused LayerNorm2d + 2x2/stride-2 conv (pixel-contiguous patches)
            patches, (B, Ho, Wo) = patchify_ds(x)
            y = downsample_ln_conv(patches, stage['ds_ln_g'], stage['ds_ln_b'],
                                   stage['ds_w'], stage['ds_b'])
            x = y.reshape(B, Ho, Wo, dims[i])
        for blk in stage['blocks']:
            x = convnext_block(x, blk)     # fused dwconv7 + LN + MLP + residual

    # --- head: norm_pre = Identity; pool + LayerNorm2d + fc fused in-kernel ---
    # TODO(synk): DropPath / head Dropout are rate-0 identities here (inference).
    logits = head_pool_ln_fc(x, params['head']['ln_g'], params['head']['ln_b'],
                             params['head']['fc_w'], params['head']['fc_b'])
    return logits[:, :num_classes], None               # mirrors forward() return


# --------------------------------- main -------------------------------------

if __name__ == "__main__":
    # small config consistent with the module: patch stem, 4 stages
    in_chans = 3
    num_classes = 10
    patch_size = 4
    depths = (1, 1, 1, 1)
    dims = (16, 32, 64, 128)
    img_size = 32
    batch = 2

    key = jax.random.PRNGKey(0)
    pkey, xkey = jax.random.split(key)
    params = init_params(pkey, in_chans, dims, depths, num_classes, patch_size)
    x = jax.random.normal(xkey, (batch, in_chans, img_size, img_size), jnp.float32)

    logits, _ = convnext_forward(params, x, patch_size=patch_size, dims=dims,
                                 num_classes=num_classes)
    jax.block_until_ready(logits)
    assert logits.shape == (batch, num_classes)
    print("KERNEL_OK")
</pallas_src>

<mosaic_0001>
module attributes {stable_mosaic.version = 11 : i64} {
  func.func @_stem_kernel(%arg0: i32, %arg1: memref<128x48xf32, #tpu.memory_space<vmem>>, %arg2: memref<48x16xbf16, #tpu.memory_space<vmem>>, %arg3: memref<1x16xf32, #tpu.memory_space<vmem>>, %arg4: memref<1x16xf32, #tpu.memory_space<vmem>>, %arg5: memref<1x16xf32, #tpu.memory_space<vmem>>, %arg6: memref<128x16xf32, #tpu.memory_space<vmem>>) attributes {dimension_semantics = [#tpu.dimension_semantics<parallel>], iteration_bounds = array<i64: 1>, scalar_prefetch = 0 : i64, scratch_operands = 0 : i64, tpu.core_type = #tpu.core_type<tc>, window_params = [{transform_indices = @transform_0, window_bounds = array<i64: 128, 48>}, {pipeline_mode = #tpu.pipeline_mode<synchronous>, transform_indices = @transform_1, window_bounds = array<i64: 48, 16>}, {pipeline_mode = #tpu.pipeline_mode<synchronous>, transform_indices = @transform_2, window_bounds = array<i64: 1, 16>}, {pipeline_mode = #tpu.pipeline_mode<synchronous>, transform_indices = @transform_3, window_bounds = array<i64: 1, 16>}, {pipeline_mode = #tpu.pipeline_mode<synchronous>, transform_indices = @transform_4, window_bounds = array<i64: 1, 16>}, {transform_indices = @transform_5, window_bounds = array<i64: 128, 16>}]} {
    %c0 = arith.constant 0 : index
    %c0_0 = arith.constant 0 : index
    %0 = vector.load %arg1[%c0, %c0_0] : memref<128x48xf32, #tpu.memory_space<vmem>>, vector<128x48xf32>
    %1 = arith.truncf %0 : vector<128x48xf32> to vector<128x48xbf16>
    %c0_1 = arith.constant 0 : index
    %c0_2 = arith.constant 0 : index
    %2 = vector.load %arg2[%c0_1, %c0_2] : memref<48x16xbf16, #tpu.memory_space<vmem>>, vector<48x16xbf16>
    %cst = arith.constant dense<0.000000e+00> : vector<128x16xf32>
    %3 = tpu.matmul %1, %2, %cst {dimension_numbers = #tpu.dot_dimension_numbers<[1], [0], [0], [1], [0, 0, 1, 1], [], []>} : vector<128x48xbf16>, vector<48x16xbf16>, vector<128x16xf32> -> vector<128x16xf32>
    %c0_3 = arith.constant 0 : index
    %c0_4 = arith.constant 0 : index
    %4 = vector.load %arg3[%c0_3, %c0_4] : memref<1x16xf32, #tpu.memory_space<vmem>>, vector<1x16xf32>
    %5 = vector.broadcast %4 : vector<1x16xf32> to vector<128x16xf32>
    %6 = arith.addf %3, %5 : vector<128x16xf32>
    %cst_5 = arith.constant dense<0.000000e+00> : vector<128xf32>
    %7 = vector.multi_reduction <add>, %6, %cst_5 [1] : vector<128x16xf32> to vector<128xf32>
    %8 = vector.shape_cast %7 : vector<128xf32> to vector<128x1xf32>
    %cst_6 = arith.constant 1.600000e+01 : f32
    %9 = vector.broadcast %cst_6 : f32 to vector<128x1xf32>
    %10 = arith.divf %8, %9 : vector<128x1xf32>
    %11 = vector.broadcast %10 : vector<128x1xf32> to vector<128x16xf32>
    %12 = arith.subf %6, %11 : vector<128x16xf32>
    %13 = arith.mulf %12, %12 : vector<128x16xf32>
    %cst_7 = arith.constant dense<0.000000e+00> : vector<128xf32>
    %14 = vector.multi_reduction <add>, %13, %cst_7 [1] : vector<128x16xf32> to vector<128xf32>
    %15 = vector.shape_cast %14 : vector<128xf32> to vector<128x1xf32>
    %cst_8 = arith.constant 1.600000e+01 : f32
    %16 = vector.broadcast %cst_8 : f32 to vector<128x1xf32>
    %17 = arith.divf %15, %16 : vector<128x1xf32>
    %18 = vector.broadcast %10 : vector<128x1xf32> to vector<128x16xf32>
    %19 = arith.subf %6, %18 : vector<128x16xf32>
    %cst_9 = arith.constant 9.99999997E-7 : f32
    %20 = vector.broadcast %cst_9 : f32 to vector<128x1xf32>
    %21 = arith.addf %17, %20 : vector<128x1xf32>
    %22 = math.rsqrt %21 : vector<128x1xf32>
    %23 = vector.broadcast %22 : vector<128x1xf32> to vector<128x16xf32>
    %24 = arith.mulf %19, %23 : vector<128x16xf32>
    %c0_10 = arith.constant 0 : index
    %c0_11 = arith.constant 0 : index
    %25 = vector.load %arg4[%c0_10, %c0_11] : memref<1x16xf32, #tpu.memory_space<vmem>>, vector<1x16xf32>
    %26 = vector.broadcast %25 : vector<1x16xf32> to vector<128x16xf32>
    %27 = arith.mulf %24, %26 : vector<128x16xf32>
    %c0_12 = arith.constant 0 : index
    %c0_13 = arith.constant 0 : index
    %28 = vector.load %arg5[%c0_12, %c0_13] : memref<1x16xf32, #tpu.memory_space<vmem>>, vector<1x16xf32>
    %29 = vector.broadcast %28 : vector<1x16xf32> to vector<128x16xf32>
    %30 = arith.addf %27, %29 : vector<128x16xf32>
    %c0_14 = arith.constant 0 : index
    %c0_15 = arith.constant 0 : index
    %31 = vector.load %arg6[%c0_14, %c0_15] : memref<128x16xf32, #tpu.memory_space<vmem>>, vector<128x16xf32>
    tpu.vector_store %arg6[%c0_14, %c0_15], %30 {strides = array<i32>} : memref<128x16xf32, #tpu.memory_space<vmem>>, vector<128x16xf32>,
    return
  }
  func.func @transform_0(%arg0: i32) -> (i32, i32) {
    %c0_i32 = arith.constant 0 : i32
    %c0_i32_0 = arith.constant 0 : i32
    return %arg0, %c0_i32 : i32, i32
  }
  func.func @transform_1(%arg0: i32) -> (i32, i32) {
    %c0_i32 = arith.constant 0 : i32
    %c0_i32_0 = arith.constant 0 : i32
    %c0_i32_1 = arith.constant 0 : i32
    return %c0_i32, %c0_i32_0 : i32, i32
  }
  func.func @transform_2(%arg0: i32) -> (i32, i32) {
    %c0_i32 = arith.constant 0 : i32
    %c0_i32_0 = arith.constant 0 : i32
    %c0_i32_1 = arith.constant 0 : i32
    return %c0_i32, %c0_i32_0 : i32, i32
  }
  func.func @transform_3(%arg0: i32) -> (i32, i32) {
    %c0_i32 = arith.constant 0 : i32
    %c0_i32_0 = arith.constant 0 : i32
    %c0_i32_1 = arith.constant 0 : i32
    return %c0_i32, %c0_i32_0 : i32, i32
  }
  func.func @transform_4(%arg0: i32) -> (i32, i32) {
    %c0_i32 = arith.constant 0 : i32
    %c0_i32_0 = arith.constant 0 : i32
    %c0_i32_1 = arith.constant 0 : i32
    return %c0_i32, %c0_i32_0 : i32, i32
  }
  func.func @transform_5(%arg0: i32) -> (i32, i32) {
    %c0_i32 = arith.constant 0 : i32
    %c0_i32_0 = arith.constant 0 : i32
    return %arg0, %c0_i32 : i32, i32
  }
}

</mosaic_0001>

<llo_original>
// kernel: tpu_custom_call.1
$region0: #{tpu_custom_call.1}
  #allocation0 [shape = 'u32[]', space=smem, size = 0x4, offset = 0x4, fixed_abs, tag = 'smem constant byte address 0x4 - core index']
  #allocation1 [shape = 'u32[72,128]{1,0:T(1,128)}', space=vmem, size = 0x9000, scoped, tag = 'internal scratch']
  %s0 = inlined_call_operand.vmem [shape: f32[128,48], index: 0, kind: input, shape index: {}]
  %s1 = inlined_call_operand.vmem [shape: bf16[48,16], index: 1, kind: input, shape index: {}]
  %s2 = inlined_call_operand.vmem [shape: f32[1,16], index: 2, kind: input, shape index: {}]
  %s3 = inlined_call_operand.vmem [shape: f32[1,16], index: 3, kind: input, shape index: {}]
  %s4 = inlined_call_operand.vmem [shape: f32[1,16], index: 4, kind: input, shape index: {}]
  %s5 = inlined_call_operand.vmem [shape: f32[128,16], index: 5, kind: output, shape index: {}]
  %s6 = sld [smem:[#allocation0]]
  $region30: #{tpu_custom_call.1} parent=0
    _
  %s8 = ssub.s32 1, %s6
  %s9 = scalar_select 0, %s8, %s6
  // Predicated region
  $region2: #{tpu_custom_call.1} parent=0 // pred_check
    _
  $region3: #{tpu_custom_call.1} parent=0 // pred_check_branch
    %11 = sbr.rel (0) target = $region5
  $region4: #{tpu_custom_call.1} parent=0 // pred_region
    _
  $region5: #{tpu_custom_call.1} parent=0 // pred_fallthru
    _
  // Predicated region
  $region6: #{tpu_custom_call.1} parent=0 // pred_check
    _
  $region7: #{tpu_custom_call.1} parent=0 // pred_check_branch
    %13 = sbr.rel (0) target = $region9
  $region8: #{tpu_custom_call.1} parent=0 // pred_region
    _
  $region9: #{tpu_custom_call.1} parent=0 // pred_fallthru
    _
  // Predicated region
  $region10: #{tpu_custom_call.1} parent=0 // pred_check
    _
  $region11: #{tpu_custom_call.1} parent=0 // pred_check_branch
    %15 = sbr.rel (0) target = $region13
  $region12: #{tpu_custom_call.1} parent=0 // pred_region
    _
  $region13: #{tpu_custom_call.1} parent=0 // pred_fallthru
    _
  // Predicated region
  $region14: #{tpu_custom_call.1} parent=0 // pred_check
    _
  $region15: #{tpu_custom_call.1} parent=0 // pred_check_branch
    %17 = sbr.rel (0) target = $region17
  $region16: #{tpu_custom_call.1} parent=0 // pred_region
    _
  $region17: #{tpu_custom_call.1} parent=0 // pred_fallthru
    _
  // Predicated region
  $region18: #{tpu_custom_call.1} parent=0 // pred_check
    _
  $region19: #{tpu_custom_call.1} parent=0 // pred_check_branch
    %19 = sbr.rel (0) target = $region21
  $region20: #{tpu_custom_call.1} parent=0 // pred_region
    _
  $region21: #{tpu_custom_call.1} parent=0 // pred_fallthru
    _
  %v21 = vld [vmem:[%s0] sm:$0xff]
  %v22 = vld [vmem:[%s0 + $0x8] sm:$0xff]
  %v23 = vld [vmem:[%s0 + $0x10] sm:$0xff]
  %v24 = vld [vmem:[%s0 + $0x18] sm:$0xff]
  %v25 = vld [vmem:[%s0 + $0x20] sm:$0xff]
  %v26 = vld [vmem:[%s0 + $0x28] sm:$0xff]
  %v27 = vld [vmem:[%s0 + $0x30] sm:$0xff]
  %v28 = vld [vmem:[%s0 + $0x38] sm:$0xff]
  %v29 = vld [vmem:[%s0 + $0x40] sm:$0xff]
  %v30 = vld [vmem:[%s0 + $0x48] sm:$0xff]
  %v31 = vld [vmem:[%s0 + $0x50] sm:$0xff]
  %v32 = vld [vmem:[%s0 + $0x58] sm:$0xff]
  %v33 = vld [vmem:[%s0 + $0x60] sm:$0xff]
  %v34 = vld [vmem:[%s0 + $0x68] sm:$0xff]
  %v35 = vld [vmem:[%s0 + $0x70] sm:$0xff]
  %v36 = vld [vmem:[%s0 + $0x78] sm:$0xff]
  %v37 = vpack.c.bf16 %v22, %v21
  %v38 = vpack.c.bf16 %v24, %v23
  %v39 = vpack.c.bf16 %v26, %v25
  %v40 = vpack.c.bf16 %v28, %v27
  %v41 = vpack.c.bf16 %v30, %v29
  %v42 = vpack.c.bf16 %v32, %v31
  %v43 = vpack.c.bf16 %v34, %v33
  %v44 = vpack.c.bf16 %v36, %v35
  %v45 = vld [vmem:[%s1] sm:$0xf]
  %v46 = vld [vmem:[%s1 + $0x4] sm:$0xf]
  %v47 = vld [vmem:[%s1 + $0x8] sm:$0xf]
  %v48 = vld [vmem:[%s1 + $0xc] sm:$0xf]
  %v49 = vld [vmem:[%s1 + $0x10] sm:$0xf]
  %v50 = vld [vmem:[%s1 + $0x14] sm:$0xf]
  %v51 = vld [vmem:[%s2] sm:$0x1]
  %v53 = vperm.slane %v51, 0
  %v61 = vunpack.c.l.b16 %v45
  %v62 = vunpack.c.l.b16 %v46
  %v63 = vunpack.c.l.b16 %v47
  %v64 = vunpack.c.l.b16 %v48
  %v65 = vunpack.c.l.b16 %v49
  %v66 = vunpack.c.l.b16 %v50
  %v67 = vpack.c.b16 %v62, %v61
  %v68 = vpack.c.b16 %v64, %v63
  %v69 = vpack.c.b16 %v66, %v65
  %vm73 = vcmask 392192
  %v75 = vsel %vm73, %v37, 0
  %v78 = vsel %vm73, %v38, 0
  %v81 = vsel %vm73, %v39, 0
  %v84 = vsel %vm73, %v40, 0
  %v87 = vsel %vm73, %v41, 0
  %v90 = vsel %vm73, %v42, 0
  %v93 = vsel %vm73, %v43, 0
  %v96 = vsel %vm73, %v44, 0
  %98 = vmatpush.bf16.msra.mxu0 0
  %99 = vmatpush.bf16.msra.mxu0 0
  %100 = vmatpush.bf16.msra.mxu0 0
  %101 = vmatpush.bf16.msra.mxu0 0
  %102 = vmatpush.bf16.msra.mxu0 0
  %103 = vmatpush.bf16.msra.mxu0 %v69
  %104 = vmatpush.bf16.msra.mxu0 %v68
  %105 = vmatpush.bf16.msra.mxu0 %v67
  %106 = vmatmul.bf16.gmra.mxu0 %v75
  %v107 = vpop.f32.mrf.mxu0
  %v108 = vadd.f32 %v53, %v107
  %v109 = vpop.f32.mrf.mxu0
  %v110 = vadd.f32 %v53, %v109
  %111 = vmatmul.bf16.gmra.mxu0 %v78
  %v112 = vpop.f32.mrf.mxu0
  %v113 = vadd.f32 %v53, %v112
  %v114 = vpop.f32.mrf.mxu0
  %v115 = vadd.f32 %v53, %v114
  %116 = vmatmul.bf16.gmra.mxu0 %v81
  %v117 = vpop.f32.mrf.mxu0
  %v118 = vadd.f32 %v53, %v117
  %v119 = vpop.f32.mrf.mxu0
  %v120 = vadd.f32 %v53, %v119
  %121 = vmatmul.bf16.gmra.mxu0 %v84
  %v122 = vpop.f32.mrf.mxu0
  %v123 = vadd.f32 %v53, %v122
  %v124 = vpop.f32.mrf.mxu0
  %v125 = vadd.f32 %v53, %v124
  %126 = vmatmul.bf16.gmra.mxu0 %v87
  %v127 = vpop.f32.mrf.mxu0
  %v128 = vadd.f32 %v53, %v127
  %v129 = vpop.f32.mrf.mxu0
  %v130 = vadd.f32 %v53, %v129
  %131 = vmatmul.bf16.gmra.mxu0 %v90
  %v132 = vpop.f32.mrf.mxu0
  %v133 = vadd.f32 %v53, %v132
  %v134 = vpop.f32.mrf.mxu0
  %v135 = vadd.f32 %v53, %v134
  %136 = vmatmul.bf16.gmra.mxu0 %v93
  %v137 = vpop.f32.mrf.mxu0
  %v138 = vadd.f32 %v53, %v137
  %v139 = vpop.f32.mrf.mxu0
  %v140 = vadd.f32 %v53, %v139
  %141 = vmatmul.bf16.gmra.mxu0 %v96
  %v142 = vpop.f32.mrf.mxu0
  %v143 = vadd.f32 %v53, %v142
  %v144 = vpop.f32.mrf.mxu0
  %v145 = vadd.f32 %v53, %v144
  %146 = vdwg.mxu0
  %vm147 = vcmask 130048
  %v148 = vsel %vm147, %v108, 0.0
  %149 = vadd.xlane.f32.xlu0 %v148
  %v150 = vpop.xlane.xlu0 %149
  %v151 = vsel %vm147, %v110, 0.0
  %152 = vadd.xlane.f32.xlu0 %v151
  %v153 = vpop.xlane.xlu0 %152
  %v154 = vsel %vm147, %v113, 0.0
  %155 = vadd.xlane.f32.xlu0 %v154
  %v156 = vpop.xlane.xlu0 %155
  %v157 = vsel %vm147, %v115, 0.0
  %158 = vadd.xlane.f32.xlu0 %v157
  %v159 = vpop.xlane.xlu0 %158
  %v160 = vsel %vm147, %v118, 0.0
  %161 = vadd.xlane.f32.xlu0 %v160
  %v162 = vpop.xlane.xlu0 %161
  %v163 = vsel %vm147, %v120, 0.0
  %164 = vadd.xlane.f32.xlu0 %v163
  %v165 = vpop.xlane.xlu0 %164
  %v166 = vsel %vm147, %v123, 0.0
  %167 = vadd.xlane.f32.xlu0 %v166
  %v168 = vpop.xlane.xlu0 %167
  %v169 = vsel %vm147, %v125, 0.0
  %170 = vadd.xlane.f32.xlu0 %v169
  %v171 = vpop.xlane.xlu0 %170
  %v172 = vsel %vm147, %v128, 0.0
  %173 = vadd.xlane.f32.xlu0 %v172
  %v174 = vpop.xlane.xlu0 %173
  %v175 = vsel %vm147, %v130, 0.0
  %176 = vadd.xlane.f32.xlu0 %v175
  %v177 = vpop.xlane.xlu0 %176
  %v178 = vsel %vm147, %v133, 0.0
  %179 = vadd.xlane.f32.xlu0 %v178
  %v180 = vpop.xlane.xlu0 %179
  %v181 = vsel %vm147, %v135, 0.0
  %182 = vadd.xlane.f32.xlu0 %v181
  %v183 = vpop.xlane.xlu0 %182
  %v184 = vsel %vm147, %v138, 0.0
  %185 = vadd.xlane.f32.xlu0 %v184
  %v186 = vpop.xlane.xlu0 %185
  %v187 = vsel %vm147, %v140, 0.0
  %188 = vadd.xlane.f32.xlu0 %v187
  %v189 = vpop.xlane.xlu0 %188
  %v190 = vsel %vm147, %v143, 0.0
  %191 = vadd.xlane.f32.xlu0 %v190
  %v192 = vpop.xlane.xlu0 %191
  %v193 = vsel %vm147, %v145, 0.0
  %194 = vadd.xlane.f32.xlu0 %v193
  %v195 = vpop.xlane.xlu0 %194
  %v196 = vrcp.pop 16.0
  %v197 = vmul.f32 16.0, %v196
  %v198 = vsub.f32 1.0, %v197
  %v199 = vmul.f32 %v196, %v198
  %v200 = vadd.f32 %v196, %v199
  %vm201 = vweird.f32 %v196
  %v202 = vsel %vm201, %v196, %v200
  %v203 = vmul.f32 %v150, %v202
  %v204 = vmul.f32 %v153, %v202
  %v205 = vmul.f32 %v156, %v202
  %v206 = vmul.f32 %v159, %v202
  %v207 = vmul.f32 %v162, %v202
  %v208 = vmul.f32 %v165, %v202
  %v209 = vmul.f32 %v168, %v202
  %v210 = vmul.f32 %v171, %v202
  %v211 = vmul.f32 %v174, %v202
  %v212 = vmul.f32 %v177, %v202
  %v213 = vmul.f32 %v180, %v202
  %v214 = vmul.f32 %v183, %v202
  %v215 = vmul.f32 %v186, %v202
  %v216 = vmul.f32 %v189, %v202
  %v217 = vmul.f32 %v192, %v202
  %v218 = vmul.f32 %v195, %v202
  %v219 = vsub.f32 %v108, %v203
  %v220 = vsub.f32 %v110, %v204
  %v221 = vsub.f32 %v113, %v205
  %v222 = vsub.f32 %v115, %v206
  %v223 = vsub.f32 %v118, %v207
  %v224 = vsub.f32 %v120, %v208
  %v225 = vsub.f32 %v123, %v209
  %v226 = vsub.f32 %v125, %v210
  %v227 = vsub.f32 %v128, %v211
  %v228 = vsub.f32 %v130, %v212
  %v229 = vsub.f32 %v133, %v213
  %v230 = vsub.f32 %v135, %v214
  %v231 = vsub.f32 %v138, %v215
  %v232 = vsub.f32 %v140, %v216
  %v233 = vsub.f32 %v143, %v217
  %v234 = vsub.f32 %v145, %v218
  %v235 = vmul.f32 %v219, %v219
  %v236 = vmul.f32 %v220, %v220
  %v237 = vmul.f32 %v221, %v221
  %v238 = vmul.f32 %v222, %v222
  %v239 = vmul.f32 %v223, %v223
  %v240 = vmul.f32 %v224, %v224
  %v241 = vmul.f32 %v225, %v225
  %v242 = vmul.f32 %v226, %v226
  %v243 = vmul.f32 %v227, %v227
  %v244 = vmul.f32 %v228, %v228
  %v245 = vmul.f32 %v229, %v229
  %v246 = vmul.f32 %v230, %v230
  %v247 = vmul.f32 %v231, %v231
  %v248 = vmul.f32 %v232, %v232
  %v249 = vmul.f32 %v233, %v233
  %v250 = vmul.f32 %v234, %v234
  %v251 = vsel %vm147, %v235, 0.0
  %252 = vadd.xlane.f32.xlu0 %v251
  %v253 = vpop.xlane.xlu0 %252
  %v254 = vsel %vm147, %v236, 0.0
  %255 = vadd.xlane.f32.xlu0 %v254
  %v256 = vpop.xlane.xlu0 %255
  %v257 = vsel %vm147, %v237, 0.0
  %258 = vadd.xlane.f32.xlu0 %v257
  %v259 = vpop.xlane.xlu0 %258
  %v260 = vsel %vm147, %v238, 0.0
  %261 = vadd.xlane.f32.xlu0 %v260
  %v262 = vpop.xlane.xlu0 %261
  %v263 = vsel %vm147, %v239, 0.0
  %264 = vadd.xlane.f32.xlu0 %v263
  %v265 = vpop.xlane.xlu0 %264
  %v266 = vsel %vm147, %v240, 0.0
  %267 = vadd.xlane.f32.xlu0 %v266
  %v268 = vpop.xlane.xlu0 %267
  %v269 = vsel %vm147, %v241, 0.0
  %270 = vadd.xlane.f32.xlu0 %v269
  %v271 = vpop.xlane.xlu0 %270
  %v272 = vsel %vm147, %v242, 0.0
  %273 = vadd.xlane.f32.xlu0 %v272
  %v274 = vpop.xlane.xlu0 %273
  %v275 = vsel %vm147, %v243, 0.0
  %276 = vadd.xlane.f32.xlu0 %v275
  %v277 = vpop.xlane.xlu0 %276
  %v278 = vsel %vm147, %v244, 0.0
  %279 = vadd.xlane.f32.xlu0 %v278
  %v280 = vpop.xlane.xlu0 %279
  %v281 = vsel %vm147, %v245, 0.0
  %282 = vadd.xlane.f32.xlu0 %v281
  %v283 = vpop.xlane.xlu0 %282
  %v284 = vsel %vm147, %v246, 0.0
  %285 = vadd.xlane.f32.xlu0 %v284
  %v286 = vpop.xlane.xlu0 %285
  %v287 = vsel %vm147, %v247, 0.0
  %288 = vadd.xlane.f32.xlu0 %v287
  %v289 = vpop.xlane.xlu0 %288
  %v290 = vsel %vm147, %v248, 0.0
  %291 = vadd.xlane.f32.xlu0 %v290
  %v292 = vpop.xlane.xlu0 %291
  %v293 = vsel %vm147, %v249, 0.0
  %294 = vadd.xlane.f32.xlu0 %v293
  %v295 = vpop.xlane.xlu0 %294
  %v296 = vsel %vm147, %v250, 0.0
  %297 = vadd.xlane.f32.xlu0 %v296
  %v298 = vpop.xlane.xlu0 %297
  %v299 = vmul.f32 %v253, %v202
  %v300 = vmul.f32 %v256, %v202
  %v301 = vmul.f32 %v259, %v202
  %v302 = vmul.f32 %v262, %v202
  %v303 = vmul.f32 %v265, %v202
  %v304 = vmul.f32 %v268, %v202
  %v305 = vmul.f32 %v271, %v202
  %v306 = vmul.f32 %v274, %v202
  %v307 = vmul.f32 %v277, %v202
  %v308 = vmul.f32 %v280, %v202
  %v309 = vmul.f32 %v283, %v202
  %v310 = vmul.f32 %v286, %v202
  %v311 = vmul.f32 %v289, %v202
  %v312 = vmul.f32 %v292, %v202
  %v313 = vmul.f32 %v295, %v202
  %v314 = vmul.f32 %v298, %v202
  %v315 = vadd.f32 %v299, 1e-06
  %v316 = vadd.f32 %v300, 1e-06
  %v317 = vadd.f32 %v301, 1e-06
  %v318 = vadd.f32 %v302, 1e-06
  %v319 = vadd.f32 %v303, 1e-06
  %v320 = vadd.f32 %v304, 1e-06
  %v321 = vadd.f32 %v305, 1e-06
  %v322 = vadd.f32 %v306, 1e-06
  %v323 = vadd.f32 %v307, 1e-06
  %v324 = vadd.f32 %v308, 1e-06
  %v325 = vadd.f32 %v309, 1e-06
  %v326 = vadd.f32 %v310, 1e-06
  %v327 = vadd.f32 %v311, 1e-06
  %v328 = vadd.f32 %v312, 1e-06
  %v329 = vadd.f32 %v313, 1e-06
  %v330 = vadd.f32 %v314, 1e-06
  %v331 = vrsqrt.pop %v315
  %v332 = vmul.f32 %v331, %v315
  %v333 = vmul.f32 %v332, %v331
  %v334 = vmul.f32 0.5, %v333
  %v335 = vsub.f32 1.5, %v334
  %v336 = vmul.f32 %v331, %v335
  %vm337 = vweird.f32 %v315
  %vm338 = vweird.f32 %v331
  %vm339 = vmor %vm337, %vm338
  %v340 = vsel %vm339, %v331, %v336
  %v341 = vrsqrt.pop %v316
  %v342 = vmul.f32 %v341, %v316
  %v343 = vmul.f32 %v342, %v341
  %v344 = vmul.f32 0.5, %v343
  %v345 = vsub.f32 1.5, %v344
  %v346 = vmul.f32 %v341, %v345
  %vm347 = vweird.f32 %v316
  %vm348 = vweird.f32 %v341
  %vm349 = vmor %vm347, %vm348
  %v350 = vsel %vm349, %v341, %v346
  %v351 = vrsqrt.pop %v317
  %v352 = vmul.f32 %v351, %v317
  %v353 = vmul.f32 %v352, %v351
  %v354 = vmul.f32 0.5, %v353
  %v355 = vsub.f32 1.5, %v354
  %v356 = vmul.f32 %v351, %v355
  %vm357 = vweird.f32 %v317
  %vm358 = vweird.f32 %v351
  %vm359 = vmor %vm357, %vm358
  %v360 = vsel %vm359, %v351, %v356
  %v361 = vrsqrt.pop %v318
  %v362 = vmul.f32 %v361, %v318
  %v363 = vmul.f32 %v362, %v361
  %v364 = vmul.f32 0.5, %v363
  %v365 = vsub.f32 1.5, %v364
  %v366 = vmul.f32 %v361, %v365
  %vm367 = vweird.f32 %v318
  %vm368 = vweird.f32 %v361
  %vm369 = vmor %vm367, %vm368
  %v370 = vsel %vm369, %v361, %v366
  %v371 = vrsqrt.pop %v319
  %v372 = vmul.f32 %v371, %v319
  %v373 = vmul.f32 %v372, %v371
  %v374 = vmul.f32 0.5, %v373
  %v375 = vsub.f32 1.5, %v374
  %v376 = vmul.f32 %v371, %v375
  %vm377 = vweird.f32 %v319
  %vm378 = vweird.f32 %v371
  %vm379 = vmor %vm377, %vm378
  %v380 = vsel %vm379, %v371, %v376
  %v381 = vrsqrt.pop %v320
  %v382 = vmul.f32 %v381, %v320
  %v383 = vmul.f32 %v382, %v381
  %v384 = vmul.f32 0.5, %v383
  %v385 = vsub.f32 1.5, %v384
  %v386 = vmul.f32 %v381, %v385
  %vm387 = vweird.f32 %v320
  %vm388 = vweird.f32 %v381
  %vm389 = vmor %vm387, %vm388
  %v390 = vsel %vm389, %v381, %v386
  %v391 = vrsqrt.pop %v321
  %v392 = vmul.f32 %v391, %v321
  %v393 = vmul.f32 %v392, %v391
  %v394 = vmul.f32 0.5, %v393
  %v395 = vsub.f32 1.5, %v394
  %v396 = vmul.f32 %v391, %v395
  %vm397 = vweird.f32 %v321
  %vm398 = vweird.f32 %v391
  %vm399 = vmor %vm397, %vm398
  %v400 = vsel %vm399, %v391, %v396
  %v401 = vrsqrt.pop %v322
  %v402 = vmul.f32 %v401, %v322
  %v403 = vmul.f32 %v402, %v401
  %v404 = vmul.f32 0.5, %v403
  %v405 = vsub.f32 1.5, %v404
  %v406 = vmul.f32 %v401, %v405
  %vm407 = vweird.f32 %v322
  %vm408 = vweird.f32 %v401
  %vm409 = vmor %vm407, %vm408
  %v410 = vsel %vm409, %v401, %v406
  %v411 = vrsqrt.pop %v323
  %v412 = vmul.f32 %v411, %v323
  %v413 = vmul.f32 %v412, %v411
  %v414 = vmul.f32 0.5, %v413
  %v415 = vsub.f32 1.5, %v414
  %v416 = vmul.f32 %v411, %v415
  %vm417 = vweird.f32 %v323
  %vm418 = vweird.f32 %v411
  %vm419 = vmor %vm417, %vm418
  %v420 = vsel %vm419, %v411, %v416
  %v421 = vrsqrt.pop %v324
  %v422 = vmul.f32 %v421, %v324
  %v423 = vmul.f32 %v422, %v421
  %v424 = vmul.f32 0.5, %v423
  %v425 = vsub.f32 1.5, %v424
  %v426 = vmul.f32 %v421, %v425
  %vm427 = vweird.f32 %v324
  %vm428 = vweird.f32 %v421
  %vm429 = vmor %vm427, %vm428
  %v430 = vsel %vm429, %v421, %v426
  %v431 = vrsqrt.pop %v325
  %v432 = vmul.f32 %v431, %v325
  %v433 = vmul.f32 %v432, %v431
  %v434 = vmul.f32 0.5, %v433
  %v435 = vsub.f32 1.5, %v434
  %v436 = vmul.f32 %v431, %v435
  %vm437 = vweird.f32 %v325
  %vm438 = vweird.f32 %v431
  %vm439 = vmor %vm437, %vm438
  %v440 = vsel %vm439, %v431, %v436
  %v441 = vrsqrt.pop %v326
  %v442 = vmul.f32 %v441, %v326
  %v443 = vmul.f32 %v442, %v441
  %v444 = vmul.f32 0.5, %v443
  %v445 = vsub.f32 1.5, %v444
  %v446 = vmul.f32 %v441, %v445
  %vm447 = vweird.f32 %v326
  %vm448 = vweird.f32 %v441
  %vm449 = vmor %vm447, %vm448
  %v450 = vsel %vm449, %v441, %v446
  %v451 = vrsqrt.pop %v327
  %v452 = vmul.f32 %v451, %v327
  %v453 = vmul.f32 %v452, %v451
  %v454 = vmul.f32 0.5, %v453
  %v455 = vsub.f32 1.5, %v454
  %v456 = vmul.f32 %v451, %v455
  %vm457 = vweird.f32 %v327
  %vm458 = vweird.f32 %v451
  %vm459 = vmor %vm457, %vm458
  %v460 = vsel %vm459, %v451, %v456
  %v461 = vrsqrt.pop %v328
  %v462 = vmul.f32 %v461, %v328
  %v463 = vmul.f32 %v462, %v461
  %v464 = vmul.f32 0.5, %v463
  %v465 = vsub.f32 1.5, %v464
  %v466 = vmul.f32 %v461, %v465
  %vm467 = vweird.f32 %v328
  %vm468 = vweird.f32 %v461
  %vm469 = vmor %vm467, %vm468
  %v470 = vsel %vm469, %v461, %v466
  %v471 = vrsqrt.pop %v329
  %v472 = vmul.f32 %v471, %v329
  %v473 = vmul.f32 %v472, %v471
  %v474 = vmul.f32 0.5, %v473
  %v475 = vsub.f32 1.5, %v474
  %v476 = vmul.f32 %v471, %v475
  %vm477 = vweird.f32 %v329
  %vm478 = vweird.f32 %v471
  %vm479 = vmor %vm477, %vm478
  %v480 = vsel %vm479, %v471, %v476
  %v481 = vrsqrt.pop %v330
  %v482 = vmul.f32 %v481, %v330
  %v483 = vmul.f32 %v482, %v481
  %v484 = vmul.f32 0.5, %v483
  %v485 = vsub.f32 1.5, %v484
  %v486 = vmul.f32 %v481, %v485
  %vm487 = vweird.f32 %v330
  %vm488 = vweird.f32 %v481
  %vm489 = vmor %vm487, %vm488
  %v490 = vsel %vm489, %v481, %v486
  %v491 = vmul.f32 %v219, %v340
  %v492 = vmul.f32 %v220, %v350
  %v493 = vmul.f32 %v221, %v360
  %v494 = vmul.f32 %v222, %v370
  %v495 = vmul.f32 %v223, %v380
  %v496 = vmul.f32 %v224, %v390
  %v497 = vmul.f32 %v225, %v400
  %v498 = vmul.f32 %v226, %v410
  %v499 = vmul.f32 %v227, %v420
  %v500 = vmul.f32 %v228, %v430
  %v501 = vmul.f32 %v229, %v440
  %v502 = vmul.f32 %v230, %v450
  %v503 = vmul.f32 %v231, %v460
  %v504 = vmul.f32 %v232, %v470
  %v505 = vmul.f32 %v233, %v480
  %v506 = vmul.f32 %v234, %v490
  %v507 = vld [vmem:[%s3] sm:$0x1]
  %v509 = vperm.slane %v507, 0
  %v511 = vmul.f32 %v491, %v509
  %v512 = vmul.f32 %v492, %v509
  %v513 = vmul.f32 %v493, %v509
  %v514 = vmul.f32 %v494, %v509
  %v515 = vmul.f32 %v495, %v509
  %v516 = vmul.f32 %v496, %v509
  %v517 = vmul.f32 %v497, %v509
  %v518 = vmul.f32 %v498, %v509
  %v519 = vmul.f32 %v499, %v509
  %v520 = vmul.f32 %v500, %v509
  %v521 = vmul.f32 %v501, %v509
  %v522 = vmul.f32 %v502, %v509
  %v523 = vmul.f32 %v503, %v509
  %v524 = vmul.f32 %v504, %v509
  %v525 = vmul.f32 %v505, %v509
  %v526 = vmul.f32 %v506, %v509
  %v527 = vld [vmem:[%s4] sm:$0x1]
  %v529 = vperm.slane %v527, 0
  %v531 = vadd.f32 %v511, %v529
  %v532 = vadd.f32 %v512, %v529
  %v533 = vadd.f32 %v513, %v529
  %v534 = vadd.f32 %v514, %v529
  %v535 = vadd.f32 %v515, %v529
  %v536 = vadd.f32 %v516, %v529
  %v537 = vadd.f32 %v517, %v529
  %v538 = vadd.f32 %v518, %v529
  %v539 = vadd.f32 %v519, %v529
  %v540 = vadd.f32 %v520, %v529
  %v541 = vadd.f32 %v521, %v529
  %v542 = vadd.f32 %v522, %v529
  %v543 = vadd.f32 %v523, %v529
  %v544 = vadd.f32 %v524, %v529
  %v545 = vadd.f32 %v525, %v529
  %v546 = vadd.f32 %v526, %v529
  %547 = vst.msk [vmem:[%s5] sm:$0xff] %vm147, %v531
  %548 = vst.msk [vmem:[%s5 + $0x8] sm:$0xff] %vm147, %v532
  %549 = vst.msk [vmem:[%s5 + $0x10] sm:$0xff] %vm147, %v533
  %550 = vst.msk [vmem:[%s5 + $0x18] sm:$0xff] %vm147, %v534
  %551 = vst.msk [vmem:[%s5 + $0x20] sm:$0xff] %vm147, %v535
  %552 = vst.msk [vmem:[%s5 + $0x28] sm:$0xff] %vm147, %v536
  %553 = vst.msk [vmem:[%s5 + $0x30] sm:$0xff] %vm147, %v537
  %554 = vst.msk [vmem:[%s5 + $0x38] sm:$0xff] %vm147, %v538
  %555 = vst.msk [vmem:[%s5 + $0x40] sm:$0xff] %vm147, %v539
  %556 = vst.msk [vmem:[%s5 + $0x48] sm:$0xff] %vm147, %v540
  %557 = vst.msk [vmem:[%s5 + $0x50] sm:$0xff] %vm147, %v541
  %558 = vst.msk [vmem:[%s5 + $0x58] sm:$0xff] %vm147, %v542
  %559 = vst.msk [vmem:[%s5 + $0x60] sm:$0xff] %vm147, %v543
  %560 = vst.msk [vmem:[%s5 + $0x68] sm:$0xff] %vm147, %v544
  %561 = vst.msk [vmem:[%s5 + $0x70] sm:$0xff] %vm147, %v545
  %562 = vst.msk [vmem:[%s5 + $0x78] sm:$0xff] %vm147, %v546
  // Predicated region
  $region22: #{tpu_custom_call.1} parent=0 // pred_check
    _
  $region23: #{tpu_custom_call.1} parent=0 // pred_check_branch
    %564 = sbr.rel (0) target = $region25
  $region24: #{tpu_custom_call.1} parent=0 // pred_region
    _
  $region25: #{tpu_custom_call.1} parent=0 // pred_fallthru
    _
  // Predicated region
  $region26: #{tpu_custom_call.1} parent=0 // pred_check
    _
  $region27: #{tpu_custom_call.1} parent=0 // pred_check_branch
    %566 = sbr.rel (0) target = $region29
  $region28: #{tpu_custom_call.1} parent=0 // pred_region
    _
  $region29: #{tpu_custom_call.1} parent=0 // pred_fallthru
    _

</llo_original>
